<compile_context>
chip_gen: v6e
topology: v6e:2x2x1
jax: 0.10.0
libtpu: 0.0.40
codegen_flags: <defaults>
</compile_context>

<pallas_src>
import jax
import jax.numpy as jnp
from jax.experimental import pallas as pl
from jax.experimental.pallas import tpu as pltpu

LANE = 128        # TPU lane width: pad matmul dims to multiples of this
SUBLANE = 8       # f32 sublane width: pad batch rows to multiples of this


def _round_up(n, m):
    return ((n + m - 1) // m) * m


def _pad2(a, rows, cols):
    return jnp.pad(a, ((0, rows - a.shape[0]), (0, cols - a.shape[1])))


# ----------------------------------------------------------------------------
# Parameter construction (mirrors Net.__init__) and packing for the kernel.
# ----------------------------------------------------------------------------
def build_params(key, X, Y, hidden_layer_sizes):
    """Deterministic parameter construction mirroring Net.__init__ (f32, [in,out])."""
    n, in_dim = X.shape
    out_dim = Y.shape[1]

    # Closed-form least-squares init of the `lin` layer (same math as __init__).
    X_ = jnp.concatenate([X, jnp.ones((n, 1), X.dtype)], axis=1)
    Theta = jnp.linalg.solve(X_.T @ X_, X_.T @ Y)            # [in_dim+1, out_dim]
    Wlin = Theta[:-1, :]                                      # [in, out]
    blin = Theta[-1:, :]                                      # [1, out]

    # MLP layers, deterministic uniform init like nn.Linear's default.
    sizes = [in_dim] + list(hidden_layer_sizes) + [out_dim]
    ws, bs = [], []
    for a, b in zip(sizes[:-1], sizes[1:]):
        key, k1, k2 = jax.random.split(key, 3)
        bound = 1.0 / jnp.sqrt(a)
        ws.append(jax.random.uniform(k1, (a, b), jnp.float32, -bound, bound))
        bs.append(jax.random.uniform(k2, (1, b), jnp.float32, -bound, bound))

    return {
        "Wlin": Wlin.astype(jnp.float32), "blin": blin.astype(jnp.float32),
        "W1": ws[0], "b1": bs[0],
        "W2": ws[1], "b2": bs[1],
        "Wout": ws[2], "bout": bs[2],
    }


def pack_params(p):
    """Zero-pad every dim to 128 lanes, fuse the lin branch into the first
    matmul ([W1 | Wlin]), and cast MXU inputs to bf16 (biases stay f32)."""
    F, H1 = p["W1"].shape
    H2 = p["W2"].shape[1]
    O = p["Wout"].shape[1]
    Fp, H1p, H2p, Op = (_round_up(d, LANE) for d in (F, H1, H2, O))

    Wlin = _pad2(p["Wlin"], Fp, Op)
    blin = _pad2(p["blin"], 1, Op)
    W1 = _pad2(p["W1"], Fp, H1p)
    b1 = _pad2(p["b1"], 1, H1p)
    W2 = _pad2(p["W2"], H1p, H2p)
    b2 = _pad2(p["b2"], 1, H2p)
    Wout = _pad2(p["Wout"], H2p, Op)
    bout = _pad2(p["bout"], 1, Op)

    packed = {
        # First MXU pass: x @ [W1 | Wlin] -> [MLP pre-act | lin output].
        "Wfirst": jnp.concatenate([W1, Wlin], axis=1).astype(jnp.bfloat16),  # [Fp, H1p+Op]
        "bfirst": jnp.concatenate([b1, blin], axis=1),                       # f32 [1, H1p+Op]
        "W2": W2.astype(jnp.bfloat16),   "b2": b2,                           # [H1p, H2p]
        "Wout": Wout.astype(jnp.bfloat16), "bout": bout,                     # [H2p, Op]
    }
    meta = {"F": F, "O": O, "Fp": Fp, "H1p": H1p, "H2p": H2p, "Op": Op}
    return packed, meta


# ----------------------------------------------------------------------------
# Kernel + wrapper.
# ----------------------------------------------------------------------------
def _make_kernel(h1_pad):
    def net_kernel(x_ref, wf_ref, bf_ref, w2_ref, b2_ref, wo_ref, bo_ref, o_ref):
        # MXU pass 1: both branches at once (bf16 inputs, f32 accumulation).
        t = jnp.dot(x_ref[...], wf_ref[...],
                    preferred_element_type=jnp.float32) + bf_ref[...]
        h = jnp.maximum(t[:, :h1_pad], 0.0)     # MLP pre-act -> ReLU (f32 VPU work)
        lin = t[:, h1_pad:]                     # lin branch already finished (f32)
        # MXU pass 2.
        h = jnp.dot(h.astype(jnp.bfloat16), w2_ref[...],
                    preferred_element_type=jnp.float32) + b2_ref[...]
        h = jnp.maximum(h, 0.0)
        # MXU pass 3 + final add (128-lane-dense output store).
        out = jnp.dot(h.astype(jnp.bfloat16), wo_ref[...],
                      preferred_element_type=jnp.float32)
        o_ref[...] = (out + bo_ref[...] + lin).astype(o_ref.dtype)
    return net_kernel


def net_forward(x, packed, meta, *, block_b=256):
    """x: [B, F] float32 -> [B, out_dim] float32."""
    B, F = x.shape
    Fp, H1p, Op, O = meta["Fp"], meta["H1p"], meta["Op"], meta["O"]

    Bp = _round_up(B, SUBLANE)
    xp = jnp.pad(x, ((0, Bp - B), (0, Fp - F))).astype(jnp.bfloat16)

    kernel = _make_kernel(H1p)
    args = (xp, packed["Wfirst"], packed["bfirst"], packed["W2"], packed["b2"],
            packed["Wout"], packed["bout"])

    if Bp <= block_b:
        # Small batch: single kernel invocation, no grid / pipeline machinery.
        vmem_spec = pl.BlockSpec(memory_space=pltpu.MemorySpace.VMEM)
        out = pl.pallas_call(
            kernel,
            out_shape=jax.ShapeDtypeStruct((Bp, Op), jnp.float32),
            in_specs=[vmem_spec] * len(args),
            out_specs=vmem_spec,
        )(*args)
    else:
        # Realistic batch: tile over rows; weights/biases VMEM-resident
        # (constant index_map); batch axis "parallel" -> both v7x TensorCores.
        TB = block_b
        Bt = _round_up(Bp, TB)
        if Bt != Bp:
            xp = jnp.pad(xp, ((0, Bt - Bp), (0, 0)))
            args = (xp,) + args[1:]
        nb = Bt // TB

        def resident(a):
            return pl.BlockSpec(a.shape, lambda i: (0,) * a.ndim)

        out = pl.pallas_call(
            kernel,
            out_shape=jax.ShapeDtypeStruct((Bt, Op), jnp.float32),
            grid=(nb,),
            in_specs=[pl.BlockSpec((TB, Fp), lambda i: (i, 0))]
                     + [resident(a) for a in args[1:]],
            out_specs=pl.BlockSpec((TB, Op), lambda i: (i, 0)),
            compiler_params=pltpu.CompilerParams(
                dimension_semantics=("parallel",)),
        )(*args)

    return out[:B, :O]


# ----------------------------------------------------------------------------
# References.
# ----------------------------------------------------------------------------
def reference_forward_f32(x, p):
    """Pure-f32 reference of the original module math."""
    lin = x @ p["Wlin"] + p["blin"]
    h = jnp.maximum(x @ p["W1"] + p["b1"], 0.0)
    h = jnp.maximum(h @ p["W2"] + p["b2"], 0.0)
    return lin + h @ p["Wout"] + p["bout"]


def reference_forward_packed(x, packed, meta):
    """Same fused / padded / bf16-input math as the kernel, in plain JAX."""
    B, F = x.shape
    Fp, H1p, O = meta["Fp"], meta["H1p"], meta["O"]
    xb = jnp.pad(x, ((0, 0), (0, Fp - F))).astype(jnp.bfloat16)
    t = jnp.dot(xb, packed["Wfirst"], preferred_element_type=jnp.float32) + packed["bfirst"]
    h = jnp.maximum(t[:, :H1p], 0.0)
    lin = t[:, H1p:]
    h = jnp.maximum(jnp.dot(h.astype(jnp.bfloat16), packed["W2"],
                            preferred_element_type=jnp.float32) + packed["b2"], 0.0)
    out = jnp.dot(h.astype(jnp.bfloat16), packed["Wout"],
                  preferred_element_type=jnp.float32) + packed["bout"] + lin
    return out[:, :O]


if __name__ == "__main__":
    key = jax.random.PRNGKey(0)
    k_data_x, k_data_y, k_params, k_x1, k_x2 = jax.random.split(key, 5)

    # "Training data" used only to derive the closed-form lin-layer weights.
    n_samples, in_dim, out_dim = 64, 16, 8
    hidden_layer_sizes = [32, 32]
    X = jax.random.normal(k_data_x, (n_samples, in_dim), jnp.float32)
    Y = jax.random.normal(k_data_y, (n_samples, out_dim), jnp.float32)

    params = build_params(k_params, X, Y, hidden_layer_sizes)
    packed, meta = pack_params(params)

    # --- small batch: single-shot (no grid) path ---
    x_small = jax.random.normal(k_x1, (8, in_dim), jnp.float32)
    out_small = jax.block_until_ready(net_forward(x_small, packed, meta))
    assert out_small.shape == (8, out_dim)
    ref_matched = reference_forward_packed(x_small, packed, meta)
    assert jnp.allclose(out_small, ref_matched, atol=1e-3, rtol=1e-3), \
        "mismatch vs matched (bf16-input) reference"
    ref_f32 = reference_forward_f32(x_small, params)
    assert jnp.allclose(out_small, ref_f32, atol=1e-1, rtol=5e-2), \
        "mismatch vs f32 reference (bf16 tolerance)"

    # --- larger batch: tiled path (grid over rows, resident weights) ---
    x_big = jax.random.normal(k_x2, (512, in_dim), jnp.float32)
    out_big = jax.block_until_ready(net_forward(x_big, packed, meta, block_b=128))
    assert out_big.shape == (512, out_dim)
    ref_matched_big = reference_forward_packed(x_big, packed, meta)
    assert jnp.allclose(out_big, ref_matched_big, atol=1e-3, rtol=1e-3), \
        "tiled path mismatch vs matched reference"
    ref_f32_big = reference_forward_f32(x_big, params)
    assert jnp.allclose(out_big, ref_f32_big, atol=1e-1, rtol=5e-2), \
        "tiled path mismatch vs f32 reference (bf16 tolerance)"

    print("KERNEL_OK")
</pallas_src>

<mosaic_0001>
module attributes {stable_mosaic.version = 11 : i64} {
  func.func @net_kernel(%arg0: memref<8x128xbf16, #tpu.memory_space<vmem>>, %arg1: memref<128x256xbf16, #tpu.memory_space<vmem>>, %arg2: memref<1x256xf32, #tpu.memory_space<vmem>>, %arg3: memref<128x128xbf16, #tpu.memory_space<vmem>>, %arg4: memref<1x128xf32, #tpu.memory_space<vmem>>, %arg5: memref<128x128xbf16, #tpu.memory_space<vmem>>, %arg6: memref<1x128xf32, #tpu.memory_space<vmem>>, %arg7: memref<8x128xf32, #tpu.memory_space<vmem>>) attributes {dimension_semantics = [], scalar_prefetch = 0 : i64, scratch_operands = 0 : i64, tpu.core_type = #tpu.core_type<tc>} {
    %c0 = arith.constant 0 : index
    %c0_0 = arith.constant 0 : index
    %0 = vector.load %arg0[%c0, %c0_0] : memref<8x128xbf16, #tpu.memory_space<vmem>>, vector<8x128xbf16>
    %c0_1 = arith.constant 0 : index
    %c0_2 = arith.constant 0 : index
    %1 = vector.load %arg1[%c0_1, %c0_2] : memref<128x256xbf16, #tpu.memory_space<vmem>>, vector<128x256xbf16>
    %cst = arith.constant dense<0.000000e+00> : vector<8x256xf32>
    %2 = tpu.matmul %0, %1, %cst {dimension_numbers = #tpu.dot_dimension_numbers<[1], [0], [0], [1], [0, 0, 1, 1], [], []>} : vector<8x128xbf16>, vector<128x256xbf16>, vector<8x256xf32> -> vector<8x256xf32>
    %c0_3 = arith.constant 0 : index
    %c0_4 = arith.constant 0 : index
    %3 = vector.load %arg2[%c0_3, %c0_4] : memref<1x256xf32, #tpu.memory_space<vmem>>, vector<1x256xf32>
    %4 = vector.broadcast %3 : vector<1x256xf32> to vector<8x256xf32>
    %5 = arith.addf %2, %4 : vector<8x256xf32>
    %6 = vector.extract_strided_slice %5 {offsets = [0, 0], sizes = [8, 128], strides = [1, 1]} : vector<8x256xf32> to vector<8x128xf32>
    %cst_5 = arith.constant 0.000000e+00 : f32
    %7 = vector.broadcast %cst_5 : f32 to vector<8x128xf32>
    %8 = arith.maximumf %6, %7 : vector<8x128xf32>
    %9 = vector.extract_strided_slice %5 {offsets = [0, 128], sizes = [8, 128], strides = [1, 1]} : vector<8x256xf32> to vector<8x128xf32>
    %10 = arith.truncf %8 : vector<8x128xf32> to vector<8x128xbf16>
    %c0_6 = arith.constant 0 : index
    %c0_7 = arith.constant 0 : index
    %11 = vector.load %arg3[%c0_6, %c0_7] : memref<128x128xbf16, #tpu.memory_space<vmem>>, vector<128x128xbf16>
    %cst_8 = arith.constant dense<0.000000e+00> : vector<8x128xf32>
    %12 = tpu.matmul %10, %11, %cst_8 {dimension_numbers = #tpu.dot_dimension_numbers<[1], [0], [0], [1], [0, 0, 1, 1], [], []>} : vector<8x128xbf16>, vector<128x128xbf16>, vector<8x128xf32> -> vector<8x128xf32>
    %c0_9 = arith.constant 0 : index
    %c0_10 = arith.constant 0 : index
    %13 = vector.load %arg4[%c0_9, %c0_10] : memref<1x128xf32, #tpu.memory_space<vmem>>, vector<1x128xf32>
    %14 = vector.broadcast %13 : vector<1x128xf32> to vector<8x128xf32>
    %15 = arith.addf %12, %14 : vector<8x128xf32>
    %cst_11 = arith.constant 0.000000e+00 : f32
    %16 = vector.broadcast %cst_11 : f32 to vector<8x128xf32>
    %17 = arith.maximumf %15, %16 : vector<8x128xf32>
    %18 = arith.truncf %17 : vector<8x128xf32> to vector<8x128xbf16>
    %c0_12 = arith.constant 0 : index
    %c0_13 = arith.constant 0 : index
    %19 = vector.load %arg5[%c0_12, %c0_13] : memref<128x128xbf16, #tpu.memory_space<vmem>>, vector<128x128xbf16>
    %cst_14 = arith.constant dense<0.000000e+00> : vector<8x128xf32>
    %20 = tpu.matmul %18, %19, %cst_14 {dimension_numbers = #tpu.dot_dimension_numbers<[1], [0], [0], [1], [0, 0, 1, 1], [], []>} : vector<8x128xbf16>, vector<128x128xbf16>, vector<8x128xf32> -> vector<8x128xf32>
    %c0_15 = arith.constant 0 : index
    %c0_16 = arith.constant 0 : index
    %21 = vector.load %arg6[%c0_15, %c0_16] : memref<1x128xf32, #tpu.memory_space<vmem>>, vector<1x128xf32>
    %22 = vector.broadcast %21 : vector<1x128xf32> to vector<8x128xf32>
    %23 = arith.addf %20, %22 : vector<8x128xf32>
    %24 = arith.addf %23, %9 : vector<8x128xf32>
    %c0_17 = arith.constant 0 : index
    %c0_18 = arith.constant 0 : index
    %25 = vector.load %arg7[%c0_17, %c0_18] : memref<8x128xf32, #tpu.memory_space<vmem>>, vector<8x128xf32>
    tpu.vector_store %arg7[%c0_17, %c0_18], %24 {strides = array<i32>} : memref<8x128xf32, #tpu.memory_space<vmem>>, vector<8x128xf32>,
    return
  }
}

</mosaic_0001>

<llo_original>
// kernel: tpu_custom_call.1
$region0: #{tpu_custom_call.1}
  #allocation0 [shape = 'u32[]', space=smem, size = 0x4, offset = 0x4, fixed_abs, tag = 'smem constant byte address 0x4 - core index']
  #allocation1 [shape = 'u32[144,128]{1,0:T(1,128)}', space=vmem, size = 0x12000, scoped, tag = 'internal scratch']
  %s0 = inlined_call_operand.hbm [shape: bf16[8,128], index: 0, kind: input, shape index: {}]
  %s1 = inlined_call_operand.hbm [shape: bf16[128,256], index: 1, kind: input, shape index: {}]
  %s2 = inlined_call_operand.vmem [shape: f32[1,256], index: 2, kind: input, shape index: {}]
  %s3 = inlined_call_operand.hbm [shape: bf16[128,128], index: 3, kind: input, shape index: {}]
  %s4 = inlined_call_operand.vmem [shape: f32[1,128], index: 4, kind: input, shape index: {}]
  %s5 = inlined_call_operand.hbm [shape: bf16[128,128], index: 5, kind: input, shape index: {}]
  %s6 = inlined_call_operand.vmem [shape: f32[1,128], index: 6, kind: input, shape index: {}]
  %s7 = inlined_call_operand.hbm [shape: f32[8,128], index: 7, kind: output, shape index: {}]
  %s8 = sld [smem:[#allocation0]]
  $region54: #{tpu_custom_call.1} parent=0
    _
  %s10 = ssub.s32 1, %s8
  %s11 = scalar_select 0, %s10, %s8
  $region1: #{tpu_custom_call.1} parent=0
    #allocation2 [shape = 'u8[2048]{0}', space=vmem, size = 0x800, scoped, tag = 'input window, operand 0, single buffered']
    #allocation3 [shape = 's32[1]{0}', space=sflag, size = 0x4, scoped, tag = 'scoped memory for tpu_custom_call.1']
    #allocation4 [shape = 's32[1]{0}', space=sflag, size = 0x4, scoped, tag = 'scoped memory for tpu_custom_call.1']
    #allocation5 [shape = 'u8[65536]{0}', space=vmem, size = 0x10000, scoped, tag = 'input window, operand 1, single buffered']
    #allocation6 [shape = 's32[1]{0}', space=sflag, size = 0x4, scoped, tag = 'scoped memory for tpu_custom_call.1']
    #allocation7 [shape = 'u8[32768]{0}', space=vmem, size = 0x8000, scoped, tag = 'input window, operand 3, single buffered']
    #allocation8 [shape = 'u8[32768]{0}', space=vmem, size = 0x8000, scoped, tag = 'input window, operand 5, single buffered']
    #allocation9 [shape = 's32[1]{0}', space=sflag, size = 0x4, scoped, tag = 'scoped memory for tpu_custom_call.1']
    #allocation10 [shape = 'u8[4096]{0}', space=vmem, size = 0x1000, scoped, tag = 'output window, operand 0, single buffered']
    %12 = vsyncpa [#allocation3], 0
    %13 = vsyncpa [#allocation6], 0
    %14 = vsyncpa [#allocation9], 0
    %15 = vsyncpa [#allocation4], 0
    // Predicated region
    $region2: #{tpu_custom_call.1} parent=1 // pred_check
      _
    $region3: #{tpu_custom_call.1} parent=1 // pred_check_branch
      %17 = sbr.rel (0) target = $region5
    $region4: #{tpu_custom_call.1} parent=1 // pred_region
      %s19 = ssub.s32 64, 64
      %20 = vsyncadd [#allocation3], %s19
      %s22 = sshll.u32 [#allocation2], 4
      %s23 = int_to_ptr.vmem [resolvable:$true] %s22
      %25 = dma.hbm_to_vmem [thread:$0]  %s0, 64, %s23, [#allocation3]
    $region5: #{tpu_custom_call.1} parent=1 // pred_fallthru
      _
    // Predicated region
    $region6: #{tpu_custom_call.1} parent=1 // pred_check
      _
    $region7: #{tpu_custom_call.1} parent=1 // pred_check_branch
      %27 = sbr.rel (0) target = $region9
    $region8: #{tpu_custom_call.1} parent=1 // pred_region
      %s29 = ssub.s32 2048, 2048
      %30 = vsyncadd [#allocation6], %s29
      %s31 = sshll.u32 [#allocation5], 4
      %s32 = int_to_ptr.vmem [resolvable:$true] %s31
      %37 = dma.hbm_to_vmem [thread:$0]  %s1, 2048, %s32, [#allocation6], 128, 128, 8
    $region9: #{tpu_custom_call.1} parent=1 // pred_fallthru
      _
    // Predicated region
    $region10: #{tpu_custom_call.1} parent=1 // pred_check
      _
    $region11: #{tpu_custom_call.1} parent=1 // pred_check_branch
      %39 = sbr.rel (0) target = $region13
    $region12: #{tpu_custom_call.1} parent=1 // pred_region
      _
    $region13: #{tpu_custom_call.1} parent=1 // pred_fallthru
      _
    // Predicated region
    $region14: #{tpu_custom_call.1} parent=1 // pred_check
      _
    $region15: #{tpu_custom_call.1} parent=1 // pred_check_branch
      %41 = sbr.rel (0) target = $region17
    $region16: #{tpu_custom_call.1} parent=1 // pred_region
      %s43 = ssub.s32 1024, 1024
      %44 = vsyncadd [#allocation6], %s43
      %s45 = sshll.u32 [#allocation7], 4
      %s46 = int_to_ptr.vmem [resolvable:$true] %s45
      %51 = dma.hbm_to_vmem [thread:$0]  %s3, 1024, %s46, [#allocation6], 64, 64, 4
    $region17: #{tpu_custom_call.1} parent=1 // pred_fallthru
      _
    // Predicated region
    $region18: #{tpu_custom_call.1} parent=1 // pred_check
      _
    $region19: #{tpu_custom_call.1} parent=1 // pred_check_branch
      %53 = sbr.rel (0) target = $region21
    $region20: #{tpu_custom_call.1} parent=1 // pred_region
      _
    $region21: #{tpu_custom_call.1} parent=1 // pred_fallthru
      _
    // Predicated region
    $region22: #{tpu_custom_call.1} parent=1 // pred_check
      _
    $region23: #{tpu_custom_call.1} parent=1 // pred_check_branch
      %55 = sbr.rel (0) target = $region25
    $region24: #{tpu_custom_call.1} parent=1 // pred_region
      %s57 = ssub.s32 1024, 1024
      %58 = vsyncadd [#allocation9], %s57
      %s59 = sshll.u32 [#allocation8], 4
      %s60 = int_to_ptr.vmem [resolvable:$true] %s59
      %65 = dma.hbm_to_vmem [thread:$0]  %s5, 1024, %s60, [#allocation9], 64, 64, 4
    $region25: #{tpu_custom_call.1} parent=1 // pred_fallthru
      _
    // Predicated region
    $region26: #{tpu_custom_call.1} parent=1 // pred_check
      _
    $region27: #{tpu_custom_call.1} parent=1 // pred_check_branch
      %67 = sbr.rel (0) target = $region29
    $region28: #{tpu_custom_call.1} parent=1 // pred_region
      _
    $region29: #{tpu_custom_call.1} parent=1 // pred_fallthru
      _
    // Predicated region
    $region30: #{tpu_custom_call.1} parent=1 // pred_check
      _
    $region31: #{tpu_custom_call.1} parent=1 // pred_check_branch
      %69 = sbr.rel (0) target = $region33
    $region32: #{tpu_custom_call.1} parent=1 // pred_region
      %70 = dma.done [#allocation3], 64
    $region33: #{tpu_custom_call.1} parent=1 // pred_fallthru
      _
    // Predicated region
    $region34: #{tpu_custom_call.1} parent=1 // pred_check
      _
    $region35: #{tpu_custom_call.1} parent=1 // pred_check_branch
      %72 = sbr.rel (0) target = $region37
    $region36: #{tpu_custom_call.1} parent=1 // pred_region
      %73 = dma.done [#allocation6], 2048
    $region37: #{tpu_custom_call.1} parent=1 // pred_fallthru
      _
    // Predicated region
    $region38: #{tpu_custom_call.1} parent=1 // pred_check
      _
    $region39: #{tpu_custom_call.1} parent=1 // pred_check_branch
      %75 = sbr.rel (0) target = $region41
    $region40: #{tpu_custom_call.1} parent=1 // pred_region
      %76 = dma.done [#allocation6], 1024
    $region41: #{tpu_custom_call.1} parent=1 // pred_fallthru
      _
    // Predicated region
    $region42: #{tpu_custom_call.1} parent=1 // pred_check
      _
    $region43: #{tpu_custom_call.1} parent=1 // pred_check_branch
      %78 = sbr.rel (0) target = $region45
    $region44: #{tpu_custom_call.1} parent=1 // pred_region
      %79 = dma.done [#allocation9], 1024
    $region45: #{tpu_custom_call.1} parent=1 // pred_fallthru
      _
    %v81 = vld [vmem:[#allocation2] sm:$0xf]
    %v82 = vld [vmem:[#allocation5] sm:$0xff]
    %v83 = vld [vmem:[#allocation5 + $0x8] sm:$0xff]
    %v84 = vld [vmem:[#allocation5 + $0x10] sm:$0xff]
    %v85 = vld [vmem:[#allocation5 + $0x18] sm:$0xff]
    %v86 = vld [vmem:[#allocation5 + $0x20] sm:$0xff]
    %v87 = vld [vmem:[#allocation5 + $0x28] sm:$0xff]
    %v88 = vld [vmem:[#allocation5 + $0x30] sm:$0xff]
    %v89 = vld [vmem:[#allocation5 + $0x38] sm:$0xff]
    %v90 = vld [vmem:[#allocation5 + $0x40] sm:$0xff]
    %v91 = vld [vmem:[#allocation5 + $0x48] sm:$0xff]
    %v92 = vld [vmem:[#allocation5 + $0x50] sm:$0xff]
    %v93 = vld [vmem:[#allocation5 + $0x58] sm:$0xff]
    %v94 = vld [vmem:[#allocation5 + $0x60] sm:$0xff]
    %v95 = vld [vmem:[#allocation5 + $0x68] sm:$0xff]
    %v96 = vld [vmem:[#allocation5 + $0x70] sm:$0xff]
    %v97 = vld [vmem:[#allocation5 + $0x78] sm:$0xff]
    %v98 = vld [vmem:[%s2] sm:$0x3]
    %v100 = vlaneseq
    %v101 = vshrl.u32 %v100, 7
    %v102 = vsub.s32 0, %v101
    %v103 = vrot.slane %v98, %v102
    %v104 = vlaneseq
    %v105 = vshrl.u32 %v104, 7
    %v106 = vsub.s32 1, %v105
    %v107 = vrot.slane %v98, %v106
    %v126 = vunpack.c.l.b16 %v82
    %v127 = vunpack.c.h.b16 %v82
    %v128 = vunpack.c.l.b16 %v83
    %v129 = vunpack.c.h.b16 %v83
    %v130 = vunpack.c.l.b16 %v84
    %v131 = vunpack.c.h.b16 %v84
    %v132 = vunpack.c.l.b16 %v85
    %v133 = vunpack.c.h.b16 %v85
    %v134 = vunpack.c.l.b16 %v86
    %v135 = vunpack.c.h.b16 %v86
    %v136 = vunpack.c.l.b16 %v87
    %v137 = vunpack.c.h.b16 %v87
    %v138 = vunpack.c.l.b16 %v88
    %v139 = vunpack.c.h.b16 %v88
    %v140 = vunpack.c.l.b16 %v89
    %v141 = vunpack.c.h.b16 %v89
    %v142 = vunpack.c.l.b16 %v90
    %v143 = vunpack.c.h.b16 %v90
    %v144 = vunpack.c.l.b16 %v91
    %v145 = vunpack.c.h.b16 %v91
    %v146 = vunpack.c.l.b16 %v92
    %v147 = vunpack.c.h.b16 %v92
    %v148 = vunpack.c.l.b16 %v93
    %v149 = vunpack.c.h.b16 %v93
    %v150 = vunpack.c.l.b16 %v94
    %v151 = vunpack.c.h.b16 %v94
    %v152 = vunpack.c.l.b16 %v95
    %v153 = vunpack.c.h.b16 %v95
    %v154 = vunpack.c.l.b16 %v96
    %v155 = vunpack.c.h.b16 %v96
    %v156 = vunpack.c.l.b16 %v97
    %v157 = vunpack.c.h.b16 %v97
    %v158 = vpack.c.b16 %v128, %v126
    %v159 = vpack.c.b16 %v129, %v127
    %v160 = vpack.c.b16 %v132, %v130
    %v161 = vpack.c.b16 %v133, %v131
    %v162 = vpack.c.b16 %v136, %v134
    %v163 = vpack.c.b16 %v137, %v135
    %v164 = vpack.c.b16 %v140, %v138
    %v165 = vpack.c.b16 %v141, %v139
    %v166 = vpack.c.b16 %v144, %v142
    %v167 = vpack.c.b16 %v145, %v143
    %v168 = vpack.c.b16 %v148, %v146
    %v169 = vpack.c.b16 %v149, %v147
    %v170 = vpack.c.b16 %v152, %v150
    %v171 = vpack.c.b16 %v153, %v151
    %v172 = vpack.c.b16 %v156, %v154
    %v173 = vpack.c.b16 %v157, %v155
    %190 = vmatprep.subr.bf16.mxu0 %v173
    %191 = vmatpush1.bf16.msra.mxu0 %v172
    %192 = vmatprep.subr.bf16.mxu0 %v171
    %193 = vmatpush1.bf16.msra.mxu0 %v170
    %194 = vmatprep.subr.bf16.mxu0 %v169
    %195 = vmatpush1.bf16.msra.mxu0 %v168
    %196 = vmatprep.subr.bf16.mxu0 %v167
    %197 = vmatpush1.bf16.msra.mxu0 %v166
    %198 = vmatprep.subr.bf16.mxu0 %v165
    %199 = vmatpush1.bf16.msra.mxu0 %v164
    %200 = vmatprep.subr.bf16.mxu0 %v163
    %201 = vmatpush1.bf16.msra.mxu0 %v162
    %202 = vmatprep.subr.bf16.mxu0 %v161
    %203 = vmatpush1.bf16.msra.mxu0 %v160
    %204 = vmatprep.subr.bf16.mxu0 %v159
    %205 = vmatpush1.bf16.msra.mxu0 %v158
    %206 = vmatprep.subr.bf16.mxu0 0
    %207 = vmatpush2.bf16.msra.mxu0 0
    %208 = vmatprep.subr.bf16.mxu0 0
    %209 = vmatpush2.bf16.msra.mxu0 0
    %210 = vmatprep.subr.bf16.mxu0 0
    %211 = vmatpush2.bf16.msra.mxu0 0
    %212 = vmatprep.subr.bf16.mxu0 0
    %213 = vmatpush2.bf16.msra.mxu0 0
    %214 = vmatprep.subr.bf16.mxu0 0
    %215 = vmatpush2.bf16.msra.mxu0 0
    %216 = vmatprep.subr.bf16.mxu0 0
    %217 = vmatpush2.bf16.msra.mxu0 0
    %218 = vmatprep.subr.bf16.mxu0 0
    %219 = vmatpush2.bf16.msra.mxu0 0
    %220 = vmatprep.subr.bf16.mxu0 0
    %221 = vmatpush2.bf16.msra.mxu0 0
    %222 = vmatprep.mubr.bf16.mxu0 0
    %223 = vmatmul.mubr.bf16.gmra.mxu0 %v81
    %v224 = vpop.f32.mrf.mxu0
    %v225 = vadd.f32 %v103, %v224
    %v226 = vpop.f32.mrf.mxu0
    %v227 = vadd.f32 %v107, %v226
    %v228 = vpop.f32.mrf.mxu0
    %v229 = vpop.f32.mrf.mxu0
    %230 = vdwg.mxu0
    %v231 = vmax.f32 %v225, 0.0
    %v232 = vpack.c.bf16 %v231, %v231
    %v233 = vld [vmem:[#allocation7] sm:$0xf]
    %v234 = vld [vmem:[#allocation7 + $0x4] sm:$0xf]
    %v235 = vld [vmem:[#allocation7 + $0x8] sm:$0xf]
    %v236 = vld [vmem:[#allocation7 + $0xc] sm:$0xf]
    %v237 = vld [vmem:[#allocation7 + $0x10] sm:$0xf]
    %v238 = vld [vmem:[#allocation7 + $0x14] sm:$0xf]
    %v239 = vld [vmem:[#allocation7 + $0x18] sm:$0xf]
    %v240 = vld [vmem:[#allocation7 + $0x1c] sm:$0xf]
    %v241 = vld [vmem:[#allocation7 + $0x20] sm:$0xf]
    %v242 = vld [vmem:[#allocation7 + $0x24] sm:$0xf]
    %v243 = vld [vmem:[#allocation7 + $0x28] sm:$0xf]
    %v244 = vld [vmem:[#allocation7 + $0x2c] sm:$0xf]
    %v245 = vld [vmem:[#allocation7 + $0x30] sm:$0xf]
    %v246 = vld [vmem:[#allocation7 + $0x34] sm:$0xf]
    %v247 = vld [vmem:[#allocation7 + $0x38] sm:$0xf]
    %v248 = vld [vmem:[#allocation7 + $0x3c] sm:$0xf]
    %v249 = vld [vmem:[%s4] sm:$0x1]
    %v251 = vlaneseq
    %v252 = vshrl.u32 %v251, 7
    %v253 = vsub.s32 0, %v252
    %v254 = vrot.slane %v249, %v253
    %v272 = vunpack.c.l.b16 %v233
    %v273 = vunpack.c.l.b16 %v234
    %v274 = vunpack.c.l.b16 %v235
    %v275 = vunpack.c.l.b16 %v236
    %v276 = vunpack.c.l.b16 %v237
    %v277 = vunpack.c.l.b16 %v238
    %v278 = vunpack.c.l.b16 %v239
    %v279 = vunpack.c.l.b16 %v240
    %v280 = vunpack.c.l.b16 %v241
    %v281 = vunpack.c.l.b16 %v242
    %v282 = vunpack.c.l.b16 %v243
    %v283 = vunpack.c.l.b16 %v244
    %v284 = vunpack.c.l.b16 %v245
    %v285 = vunpack.c.l.b16 %v246
    %v286 = vunpack.c.l.b16 %v247
    %v287 = vunpack.c.l.b16 %v248
    %v288 = vpack.c.b16 %v273, %v272
    %v289 = vpack.c.b16 %v275, %v274
    %v290 = vpack.c.b16 %v277, %v276
    %v291 = vpack.c.b16 %v279, %v278
    %v292 = vpack.c.b16 %v281, %v280
    %v293 = vpack.c.b16 %v283, %v282
    %v294 = vpack.c.b16 %v285, %v284
    %v295 = vpack.c.b16 %v287, %v286
    %304 = vmatprep.subr.bf16.mxu0 0
    %305 = vmatpush1.bf16.msra.mxu0 %v295
    %306 = vmatprep.subr.bf16.mxu0 0
    %307 = vmatpush1.bf16.msra.mxu0 %v294
    %308 = vmatprep.subr.bf16.mxu0 0
    %309 = vmatpush1.bf16.msra.mxu0 %v293
    %310 = vmatprep.subr.bf16.mxu0 0
    %311 = vmatpush1.bf16.msra.mxu0 %v292
    %312 = vmatprep.subr.bf16.mxu0 0
    %313 = vmatpush1.bf16.msra.mxu0 %v291
    %314 = vmatprep.subr.bf16.mxu0 0
    %315 = vmatpush1.bf16.msra.mxu0 %v290
    %316 = vmatprep.subr.bf16.mxu0 0
    %317 = vmatpush1.bf16.msra.mxu0 %v289
    %318 = vmatprep.subr.bf16.mxu0 0
    %319 = vmatpush1.bf16.msra.mxu0 %v288
    %320 = vmatprep.subr.bf16.mxu0 0
    %321 = vmatpush2.bf16.msra.mxu0 0
    %322 = vmatprep.subr.bf16.mxu0 0
    %323 = vmatpush2.bf16.msra.mxu0 0
    %324 = vmatprep.subr.bf16.mxu0 0
    %325 = vmatpush2.bf16.msra.mxu0 0
    %326 = vmatprep.subr.bf16.mxu0 0
    %327 = vmatpush2.bf16.msra.mxu0 0
    %328 = vmatprep.subr.bf16.mxu0 0
    %329 = vmatpush2.bf16.msra.mxu0 0
    %330 = vmatprep.subr.bf16.mxu0 0
    %331 = vmatpush2.bf16.msra.mxu0 0
    %332 = vmatprep.subr.bf16.mxu0 0
    %333 = vmatpush2.bf16.msra.mxu0 0
    %334 = vmatprep.subr.bf16.mxu0 0
    %335 = vmatpush2.bf16.msra.mxu0 0
    %336 = vmatprep.mubr.bf16.mxu0 0
    %337 = vmatmul.mubr.bf16.gmra.mxu0 %v232
    %v338 = vpop.f32.mrf.mxu0
    %v339 = vadd.f32 %v254, %v338
    %v340 = vpop.f32.mrf.mxu0
    %v341 = vpop.f32.mrf.mxu0
    %v342 = vpop.f32.mrf.mxu0
    %343 = vdwg.mxu0
    %v344 = vmax.f32 %v339, 0.0
    %v345 = vpack.c.bf16 %v344, %v344
    %v346 = vld [vmem:[#allocation8] sm:$0xf]
    %v347 = vld [vmem:[#allocation8 + $0x4] sm:$0xf]
    %v348 = vld [vmem:[#allocation8 + $0x8] sm:$0xf]
    %v349 = vld [vmem:[#allocation8 + $0xc] sm:$0xf]
    %v350 = vld [vmem:[#allocation8 + $0x10] sm:$0xf]
    %v351 = vld [vmem:[#allocation8 + $0x14] sm:$0xf]
    %v352 = vld [vmem:[#allocation8 + $0x18] sm:$0xf]
    %v353 = vld [vmem:[#allocation8 + $0x1c] sm:$0xf]
    %v354 = vld [vmem:[#allocation8 + $0x20] sm:$0xf]
    %v355 = vld [vmem:[#allocation8 + $0x24] sm:$0xf]
    %v356 = vld [vmem:[#allocation8 + $0x28] sm:$0xf]
    %v357 = vld [vmem:[#allocation8 + $0x2c] sm:$0xf]
    %v358 = vld [vmem:[#allocation8 + $0x30] sm:$0xf]
    %v359 = vld [vmem:[#allocation8 + $0x34] sm:$0xf]
    %v360 = vld [vmem:[#allocation8 + $0x38] sm:$0xf]
    %v361 = vld [vmem:[#allocation8 + $0x3c] sm:$0xf]
    %v362 = vld [vmem:[%s6] sm:$0x1]
    %v364 = vlaneseq
    %v365 = vshrl.u32 %v364, 7
    %v366 = vsub.s32 0, %v365
    %v367 = vrot.slane %v362, %v366
    %v385 = vunpack.c.l.b16 %v346
    %v386 = vunpack.c.l.b16 %v347
    %v387 = vunpack.c.l.b16 %v348
    %v388 = vunpack.c.l.b16 %v349
    %v389 = vunpack.c.l.b16 %v350
    %v390 = vunpack.c.l.b16 %v351
    %v391 = vunpack.c.l.b16 %v352
    %v392 = vunpack.c.l.b16 %v353
    %v393 = vunpack.c.l.b16 %v354
    %v394 = vunpack.c.l.b16 %v355
    %v395 = vunpack.c.l.b16 %v356
    %v396 = vunpack.c.l.b16 %v357
    %v397 = vunpack.c.l.b16 %v358
    %v398 = vunpack.c.l.b16 %v359
    %v399 = vunpack.c.l.b16 %v360
    %v400 = vunpack.c.l.b16 %v361
    %v401 = vpack.c.b16 %v386, %v385
    %v402 = vpack.c.b16 %v388, %v387
    %v403 = vpack.c.b16 %v390, %v389
    %v404 = vpack.c.b16 %v392, %v391
    %v405 = vpack.c.b16 %v394, %v393
    %v406 = vpack.c.b16 %v396, %v395
    %v407 = vpack.c.b16 %v398, %v397
    %v408 = vpack.c.b16 %v400, %v399
    %417 = vmatprep.subr.bf16.mxu0 0
    %418 = vmatpush1.bf16.msra.mxu0 %v408
    %419 = vmatprep.subr.bf16.mxu0 0
    %420 = vmatpush1.bf16.msra.mxu0 %v407
    %421 = vmatprep.subr.bf16.mxu0 0
    %422 = vmatpush1.bf16.msra.mxu0 %v406
    %423 = vmatprep.subr.bf16.mxu0 0
    %424 = vmatpush1.bf16.msra.mxu0 %v405
    %425 = vmatprep.subr.bf16.mxu0 0
    %426 = vmatpush1.bf16.msra.mxu0 %v404
    %427 = vmatprep.subr.bf16.mxu0 0
    %428 = vmatpush1.bf16.msra.mxu0 %v403
    %429 = vmatprep.subr.bf16.mxu0 0
    %430 = vmatpush1.bf16.msra.mxu0 %v402
    %431 = vmatprep.subr.bf16.mxu0 0
    %432 = vmatpush1.bf16.msra.mxu0 %v401
    %433 = vmatprep.subr.bf16.mxu0 0
    %434 = vmatpush2.bf16.msra.mxu0 0
    %435 = vmatprep.subr.bf16.mxu0 0
    %436 = vmatpush2.bf16.msra.mxu0 0
    %437 = vmatprep.subr.bf16.mxu0 0
    %438 = vmatpush2.bf16.msra.mxu0 0
    %439 = vmatprep.subr.bf16.mxu0 0
    %440 = vmatpush2.bf16.msra.mxu0 0
    %441 = vmatprep.subr.bf16.mxu0 0
    %442 = vmatpush2.bf16.msra.mxu0 0
    %443 = vmatprep.subr.bf16.mxu0 0
    %444 = vmatpush2.bf16.msra.mxu0 0
    %445 = vmatprep.subr.bf16.mxu0 0
    %446 = vmatpush2.bf16.msra.mxu0 0
    %447 = vmatprep.subr.bf16.mxu0 0
    %448 = vmatpush2.bf16.msra.mxu0 0
    %449 = vmatprep.mubr.bf16.mxu0 0
    %450 = vmatmul.mubr.bf16.gmra.mxu0 %v345
    %v451 = vpop.f32.mrf.mxu0
    %v452 = vadd.f32 %v367, %v451
    %v453 = vpop.f32.mrf.mxu0
    %v454 = vpop.f32.mrf.mxu0
    %v455 = vpop.f32.mrf.mxu0
    %456 = vdwg.mxu0
    %v457 = vadd.f32 %v452, %v227
    %458 = vst [vmem:[#allocation10] sm:$0xff] %v457
    // Predicated region
    $region46: #{tpu_custom_call.1} parent=1 // pred_check
      _
    $region47: #{tpu_custom_call.1} parent=1 // pred_check_branch
      %460 = sbr.rel (0) target = $region49
    $region48: #{tpu_custom_call.1} parent=1 // pred_region
      %s462 = ssub.s32 128, 128
      %463 = vsyncadd [#allocation4], %s462
      %s465 = sshll.u32 [#allocation10], 4
      %s466 = int_to_ptr.vmem [resolvable:$true] %s465
      %468 = dma.vmem_to_hbm [thread:$0]  %s466, 128, %s7, [#allocation4]
    $region49: #{tpu_custom_call.1} parent=1 // pred_fallthru
      _
    // Predicated region
    $region50: #{tpu_custom_call.1} parent=1 // pred_check
      _
    $region51: #{tpu_custom_call.1} parent=1 // pred_check_branch
      %470 = sbr.rel (0) target = $region53
    $region52: #{tpu_custom_call.1} parent=1 // pred_region
      %471 = dma.done [#allocation4], 128
    $region53: #{tpu_custom_call.1} parent=1 // pred_fallthru
      _
    %472 = vsyncpa [#allocation3], 1
    %473 = vsyncpa [#allocation6], 1
    %474 = vsyncpa [#allocation9], 1
    %475 = vsyncpa [#allocation4], 1

</llo_original>
